<compile_context>
chip_gen: v5e
topology: v5e:2x2
jax: 0.10.0
libtpu: 0.0.40
codegen_flags: <defaults>
</compile_context>

<pallas_src>
import functools

import jax
import jax.numpy as jnp
from jax import lax
from jax.experimental import pallas as pl
from jax.experimental.pallas import tpu as pltpu


_MM_DTYPE = jnp.bfloat16          # MXU operand dtype (accumulation stays f32)
_LN_EPS = 1e-5
_NEG_INF = -1e9
_VMEM_LIMIT = 48 * 1024 * 1024    # below v7x's 64 MiB physical VMEM


# ------------------------------ in-kernel helpers ---------------------------


def _mm(a, b):
    """a @ b with bf16 MXU operands and f32 accumulation."""
    return jnp.dot(a.astype(_MM_DTYPE), b.astype(_MM_DTYPE),
                   preferred_element_type=jnp.float32)


def _mm_nt(a, b):
    """a @ b.T without materializing the transpose (native NT MXU matmul)."""
    return lax.dot_general(a.astype(_MM_DTYPE), b.astype(_MM_DTYPE),
                           (((1,), (1,)), ((), ())),
                           preferred_element_type=jnp.float32)


def _softmax_last(x):
    """Row softmax in f32; the divide goes to the EUP via approx reciprocal."""
    m = jnp.max(x, axis=-1, keepdims=True)
    e = jnp.exp(x - m)
    d = jnp.sum(e, axis=-1, keepdims=True)
    return e * pl.reciprocal(d, approx=True)


def _layernorm(x, g, b):
    """torch-style LayerNorm over the last dim (biased variance), f32."""
    mean = jnp.mean(x, axis=-1, keepdims=True)
    var = jnp.mean((x - mean) ** 2, axis=-1, keepdims=True)
    return (x - mean) * lax.rsqrt(var + _LN_EPS) * g + b


def _row_tile(m):
    """Row tile: large, 8-sublane aligned, and giving >=2 grid steps when the
    problem permits (keeps both v7x TensorCores busy)."""
    if m <= 16:
        return m
    if m <= 512:
        half = m // 2
        return half if half % 8 == 0 else m
    for t in (512, 256, 128):
        if m % t == 0:
            return t
    return 256        # grid uses cdiv; ragged tail is masked by Pallas


# --------------------------- kernel A: fused QKV ----------------------------


def _qkv_proj_kernel(x_ref, pos_ref, wqk_ref, bqk_ref, wv_ref, bv_ref, o_ref,
                     *, n_qk):
    x = x_ref[...]                                    # (bm, D) f32
    qk_in = x + pos_ref[...]                          # q = k = src + pos
    qk = _mm(qk_in, wqk_ref[...]) + bqk_ref[...]      # (bm, 2D)
    v = _mm(x, wv_ref[...]) + bv_ref[...]             # (bm, D)
    # direct lane-slice stores (no concatenated intermediate)
    o_ref[:, :n_qk] = qk.astype(o_ref.dtype)
    o_ref[:, n_qk:] = v.astype(o_ref.dtype)


def qkv_projection(x2d, pos2d, wqk, bqk, wv, bv):
    M, D = x2d.shape
    n_qk = wqk.shape[1]
    n_v = wv.shape[1]
    bm = _row_tile(M)
    kernel = functools.partial(_qkv_proj_kernel, n_qk=n_qk)
    return pl.pallas_call(
        kernel,
        out_shape=jax.ShapeDtypeStruct((M, n_qk + n_v), _MM_DTYPE),
        grid=(pl.cdiv(M, bm),),
        in_specs=[
            pl.BlockSpec((bm, D), lambda i: (i, 0)),
            pl.BlockSpec((bm, D), lambda i: (i, 0)),
            pl.BlockSpec((D, n_qk), lambda i: (0, 0)),
            pl.BlockSpec((1, n_qk), lambda i: (0, 0)),
            pl.BlockSpec((D, n_v), lambda i: (0, 0)),
            pl.BlockSpec((1, n_v), lambda i: (0, 0)),
        ],
        out_specs=pl.BlockSpec((bm, n_qk + n_v), lambda i: (i, 0)),
        compiler_params=pltpu.CompilerParams(
            dimension_semantics=("parallel",),
            vmem_limit_bytes=_VMEM_LIMIT),
    )(x2d, pos2d, wqk, bqk.reshape(1, n_qk), wv, bv.reshape(1, n_v))


# --------- kernel B: AiA attention + out-proj + residual + LayerNorm1 -------


def _aia_block_kernel(qkv_ref, kpm_ref, inr_ref, wqik_ref, bqik_ref, wo_ref,
                      bo_ref, src_ref, g1_ref, b1_ref, o_ref, acc_ref, *,
                      nhead, head_dim, scale, match_dim, use_aia):
    d = nhead * head_dim
    md = match_dim
    mask_row = jnp.where(kpm_ref[0] != 0, _NEG_INF, 0.0)   # (1, S) f32 additive
    pos = inr_ref[0]                                       # (S, md) f32
    wqik_t = wqik_ref[...]                                 # (2md, S) bf16
    bqik = bqik_ref[...]                                   # (1, 2md) f32
    inv_sqrt_md = md ** -0.5

    for h in range(nhead):                   # static unroll over heads
        lo = h * head_dim
        hi = lo + head_dim
        qh = qkv_ref[0, :, lo:hi]            # (Sq, hd) bf16
        kh = qkv_ref[0, :, d + lo:d + hi]    # (Sk, hd)
        vh = qkv_ref[0, :, 2 * d + lo:2 * d + hi]

        # outer correlation map M: (Sq, Sk)
        scores = _mm_nt(qh, kh) * scale

        if use_aia:
            # Inner projections via the identity (K Q^T) Wq = K (Wq^T Q)^T:
            # no transposed score map, no redundant MXU pass, native NN/NT only.
            pqk = _mm(wqik_t, qh)                           # (2md, hd)
            iqk = _mm_nt(kh, pqk) * scale + bqik            # (Sk, 2md)
            iq = iqk[:, :md] + pos                          # (Sk, md)
            ik = iqk[:, md:] + pos                          # (Sk, md)
            iattn = _softmax_last(_mm_nt(iq, ik) * inv_sqrt_md)   # (Sk, Sk)
            # refine.T = iattn @ scores.T  ->  scores @ iattn.T (NT), residual
            scores = scores + _mm_nt(scores, iattn)
            # TODO(synk): key-padding mask is applied only to the outer scores;
            #             exact AiAModule masking of the inner path is unknown.

        attn = _softmax_last(scores + mask_row)             # f32 softmax
        acc_ref[:, lo:hi] = _mm(attn, vh)     # per-head VMEM scratch store

    # fused out-projection + residual + LayerNorm1, single lane-dense store
    y = _mm(acc_ref[...], wo_ref[...]) + bo_ref[...]
    z = src_ref[0] + y                                      # dropout1 = id
    o_ref[0] = _layernorm(z, g1_ref[...], b1_ref[...]).astype(o_ref.dtype)


def aia_attention_block(qkv, kpm_i32, inr_b, wqik_t, bqik, wo, bo, src_b3,
                        ln1_g, ln1_b, *, nhead, head_dim, scale, match_dim,
                        use_aia=True):
    """qkv: (B,S,3D) bf16; kpm_i32: (B,1,S) int32; inr_b: (B,S,md) f32."""
    B, S, three_d = qkv.shape
    D = nhead * head_dim
    md = match_dim
    two_md = 2 * md
    feat = wqik_t.shape[1]
    assert feat == S, "AiA inner attention requires feat_size == sequence len"
    kernel = functools.partial(
        _aia_block_kernel, nhead=nhead, head_dim=head_dim, scale=scale,
        match_dim=match_dim, use_aia=use_aia)
    return pl.pallas_call(
        kernel,
        out_shape=jax.ShapeDtypeStruct((B, S, D), _MM_DTYPE),
        grid=(B,),
        in_specs=[
            pl.BlockSpec((1, S, three_d), lambda b: (b, 0, 0)),
            pl.BlockSpec((1, 1, S), lambda b: (b, 0, 0)),
            pl.BlockSpec((1, S, md), lambda b: (b, 0, 0)),
            pl.BlockSpec((two_md, feat), lambda b: (0, 0)),
            pl.BlockSpec((1, two_md), lambda b: (0, 0)),
            pl.BlockSpec((D, D), lambda b: (0, 0)),
            pl.BlockSpec((1, D), lambda b: (0, 0)),
            pl.BlockSpec((1, S, D), lambda b: (b, 0, 0)),
            pl.BlockSpec((1, D), lambda b: (0, 0)),
            pl.BlockSpec((1, D), lambda b: (0, 0)),
        ],
        out_specs=pl.BlockSpec((1, S, D), lambda b: (b, 0, 0)),
        scratch_shapes=[pltpu.VMEM((S, D), jnp.float32)],
        compiler_params=pltpu.CompilerParams(
            dimension_semantics=("parallel",),
            vmem_limit_bytes=_VMEM_LIMIT),
    )(qkv, kpm_i32, inr_b, wqik_t, bqik.reshape(1, two_md), wo,
      bo.reshape(1, D), src_b3, ln1_g.reshape(1, D), ln1_b.reshape(1, D))


# ------------------- kernel C: FFN + residual + LayerNorm2 ------------------


def _ffn_add_ln_kernel(x_ref, w1_ref, b1_ref, w2_ref, b2_ref, g_ref, b_ref,
                       o_ref):
    x = x_ref[...].astype(jnp.float32)                         # bf16 -> f32
    h = jnp.maximum(_mm(x, w1_ref[...]) + b1_ref[...], 0.0)    # relu
    y = _mm(h, w2_ref[...]) + b2_ref[...]
    z = x + y                                                  # dropout2 = id
    o_ref[...] = _layernorm(z, g_ref[...], b_ref[...]).astype(o_ref.dtype)


def ffn_add_layernorm(x2d, w1, b1, w2, b2, gamma, beta):
    M, D = x2d.shape
    F = w1.shape[1]
    bm = _row_tile(M)
    return pl.pallas_call(
        _ffn_add_ln_kernel,
        out_shape=jax.ShapeDtypeStruct((M, D), jnp.float32),
        grid=(pl.cdiv(M, bm),),
        in_specs=[
            pl.BlockSpec((bm, D), lambda i: (i, 0)),
            pl.BlockSpec((D, F), lambda i: (0, 0)),
            pl.BlockSpec((1, F), lambda i: (0, 0)),
            pl.BlockSpec((F, D), lambda i: (0, 0)),
            pl.BlockSpec((1, D), lambda i: (0, 0)),
            pl.BlockSpec((1, D), lambda i: (0, 0)),
            pl.BlockSpec((1, D), lambda i: (0, 0)),
        ],
        out_specs=pl.BlockSpec((bm, D), lambda i: (i, 0)),
        compiler_params=pltpu.CompilerParams(
            dimension_semantics=("parallel",),
            vmem_limit_bytes=_VMEM_LIMIT),
    )(x2d, w1, b1.reshape(1, F), w2, b2.reshape(1, D),
      gamma.reshape(1, D), beta.reshape(1, D))


# ------------------------------ forward pass --------------------------------


def transformer_encoder_layer(src, pos, inr, key_padding_mask, params, nhead):
    """Forward of AiATrack TransformerEncoderLayer (post-norm, relu, eval)."""
    S, B, D = src.shape
    H = nhead
    hd = D // H
    md = params["inner_q_w"].shape[1]
    M = B * S

    # Internal layout is (B, S, D); heads packed along the lane-dense last dim.
    src_b = jnp.transpose(src, (1, 0, 2))                     # (B, S, D) f32
    src2d = src_b.reshape(M, D)
    pos2d = jnp.transpose(pos, (1, 0, 2)).reshape(M, D)
    inr_b = jnp.transpose(inr, (1, 0, 2))                     # (B, S, md) f32

    cast = lambda w: w.astype(_MM_DTYPE)                      # bf16 weights

    # Fused q/k/v in-projection (q/k from src+pos, v from src).
    wqk = cast(jnp.concatenate([params["wq"], params["wk"]], axis=1))  # (D,2D)
    bqk = jnp.concatenate([params["bq"], params["bk"]], axis=0)        # (2D,)
    qkv = qkv_projection(src2d, pos2d, wqk, bqk, cast(params["wv"]),
                         params["bv"]).reshape(B, S, 3 * D)   # bf16, free view

    # bool padding mask -> int32; additive -1e9 mask is built inside kernel B.
    kpm = key_padding_mask.astype(jnp.int32).reshape(B, 1, S)

    # AiA inner q|k weights: concatenated and pre-transposed so the kernel
    # needs only native NN / NT matmuls (see identity in _aia_block_kernel).
    wqik_t = cast(jnp.concatenate([params["inner_q_w"], params["inner_k_w"]],
                                  axis=1).T)                  # (2*md, feat)
    bqik = jnp.concatenate([params["inner_q_b"], params["inner_k_b"]], axis=0)

    # attention + out-projection + residual + LayerNorm1 (one kernel)
    x = aia_attention_block(qkv, kpm, inr_b, wqik_t, bqik, cast(params["wo"]),
                            params["bo"], src_b, params["ln1_g"],
                            params["ln1_b"], nhead=H, head_dim=hd,
                            scale=hd ** -0.5, match_dim=md, use_aia=True)

    # FFN + residual + LayerNorm2 (one kernel)
    out = ffn_add_layernorm(x.reshape(M, D), cast(params["ffn_w1"]),
                            params["ffn_b1"], cast(params["ffn_w2"]),
                            params["ffn_b2"], params["ln2_g"],
                            params["ln2_b"])

    return out.reshape(B, S, D).transpose(1, 0, 2)            # (S, B, D) f32


def init_params(key, d_model, dim_feedforward, match_dim, feat_size):
    # Deterministic synthetic parameters. Linear weights are stored
    # (in_features, out_features), i.e. already transposed vs. torch layout.
    ks = jax.random.split(key, 10)
    s = 0.05
    n = jax.random.normal
    return {
        "wq": n(ks[0], (d_model, d_model), jnp.float32) * s,
        "bq": jnp.zeros((d_model,), jnp.float32),
        "wk": n(ks[1], (d_model, d_model), jnp.float32) * s,
        "bk": jnp.zeros((d_model,), jnp.float32),
        "wv": n(ks[2], (d_model, d_model), jnp.float32) * s,
        "bv": jnp.zeros((d_model,), jnp.float32),
        "wo": n(ks[3], (d_model, d_model), jnp.float32) * s,
        "bo": jnp.zeros((d_model,), jnp.float32),
        "inner_q_w": n(ks[4], (feat_size, match_dim), jnp.float32) * s,
        "inner_q_b": jnp.zeros((match_dim,), jnp.float32),
        "inner_k_w": n(ks[5], (feat_size, match_dim), jnp.float32) * s,
        "inner_k_b": jnp.zeros((match_dim,), jnp.float32),
        "ffn_w1": n(ks[6], (d_model, dim_feedforward), jnp.float32) * s,
        "ffn_b1": jnp.zeros((dim_feedforward,), jnp.float32),
        "ffn_w2": n(ks[7], (dim_feedforward, d_model), jnp.float32) * s,
        "ffn_b2": jnp.zeros((d_model,), jnp.float32),
        "ln1_g": jnp.ones((d_model,), jnp.float32),
        "ln1_b": jnp.zeros((d_model,), jnp.float32),
        "ln2_g": jnp.ones((d_model,), jnp.float32),
        "ln2_b": jnp.zeros((d_model,), jnp.float32),
    }


if __name__ == "__main__":
    # Small synthetic config: d_model=32, nhead=4, dim_feedforward=64,
    # seq=16 (== feat_size for the AiA inner attention), batch=2, match_dim=16.
    S, B, D, H = 16, 2, 32, 4
    FFN, MATCH_DIM, FEAT_SIZE = 64, 16, 16

    key = jax.random.PRNGKey(0)
    k_src, k_pos, k_inr, k_par = jax.random.split(key, 4)

    src = jax.random.normal(k_src, (S, B, D), jnp.float32)
    pos = jax.random.normal(k_pos, (S, B, D), jnp.float32)
    inr = jax.random.normal(k_inr, (S, B, MATCH_DIM), jnp.float32)
    key_padding_mask = jnp.zeros((B, S), jnp.bool_).at[1, -3:].set(True)

    params = init_params(k_par, D, FFN, MATCH_DIM, FEAT_SIZE)

    out = transformer_encoder_layer(src, pos, inr, key_padding_mask, params,
                                    nhead=H)
    out = jax.block_until_ready(out)

    assert out.shape == (S, B, D), out.shape
    assert bool(jnp.isfinite(out).all())
    print("KERNEL_OK")
</pallas_src>

<mosaic_0001>
module attributes {stable_mosaic.version = 11 : i64} {
  func.func @_qkv_proj_kernel(%arg0: i32, %arg1: memref<16x32xf32, #tpu.memory_space<vmem>>, %arg2: memref<16x32xf32, #tpu.memory_space<vmem>>, %arg3: memref<32x64xbf16, #tpu.memory_space<vmem>>, %arg4: memref<1x64xf32, #tpu.memory_space<vmem>>, %arg5: memref<32x32xbf16, #tpu.memory_space<vmem>>, %arg6: memref<1x32xf32, #tpu.memory_space<vmem>>, %arg7: memref<16x96xbf16, #tpu.memory_space<vmem>>) attributes {dimension_semantics = [#tpu.dimension_semantics<parallel>], iteration_bounds = array<i64: 2>, scalar_prefetch = 0 : i64, scratch_operands = 0 : i64, tpu.core_type = #tpu.core_type<tc>, window_params = [{transform_indices = @transform_0, window_bounds = array<i64: 16, 32>}, {transform_indices = @transform_1, window_bounds = array<i64: 16, 32>}, {pipeline_mode = #tpu.pipeline_mode<synchronous>, transform_indices = @transform_2, window_bounds = array<i64: 32, 64>}, {pipeline_mode = #tpu.pipeline_mode<synchronous>, transform_indices = @transform_3, window_bounds = array<i64: 1, 64>}, {pipeline_mode = #tpu.pipeline_mode<synchronous>, transform_indices = @transform_4, window_bounds = array<i64: 32, 32>}, {pipeline_mode = #tpu.pipeline_mode<synchronous>, transform_indices = @transform_5, window_bounds = array<i64: 1, 32>}, {transform_indices = @transform_6, window_bounds = array<i64: 16, 96>}]} {
    %c0 = arith.constant 0 : index
    %c0_0 = arith.constant 0 : index
    %0 = vector.load %arg1[%c0, %c0_0] : memref<16x32xf32, #tpu.memory_space<vmem>>, vector<16x32xf32>
    %c0_1 = arith.constant 0 : index
    %c0_2 = arith.constant 0 : index
    %1 = vector.load %arg2[%c0_1, %c0_2] : memref<16x32xf32, #tpu.memory_space<vmem>>, vector<16x32xf32>
    %2 = arith.addf %0, %1 : vector<16x32xf32>
    %c0_3 = arith.constant 0 : index
    %c0_4 = arith.constant 0 : index
    %3 = vector.load %arg3[%c0_3, %c0_4] : memref<32x64xbf16, #tpu.memory_space<vmem>>, vector<32x64xbf16>
    %4 = arith.truncf %2 : vector<16x32xf32> to vector<16x32xbf16>
    %cst = arith.constant dense<0.000000e+00> : vector<16x64xf32>
    %5 = tpu.matmul %4, %3, %cst {dimension_numbers = #tpu.dot_dimension_numbers<[1], [0], [0], [1], [0, 0, 1, 1], [], []>} : vector<16x32xbf16>, vector<32x64xbf16>, vector<16x64xf32> -> vector<16x64xf32>
    %c0_5 = arith.constant 0 : index
    %c0_6 = arith.constant 0 : index
    %6 = vector.load %arg4[%c0_5, %c0_6] : memref<1x64xf32, #tpu.memory_space<vmem>>, vector<1x64xf32>
    %7 = vector.broadcast %6 : vector<1x64xf32> to vector<16x64xf32>
    %8 = arith.addf %5, %7 : vector<16x64xf32>
    %c0_7 = arith.constant 0 : index
    %c0_8 = arith.constant 0 : index
    %9 = vector.load %arg5[%c0_7, %c0_8] : memref<32x32xbf16, #tpu.memory_space<vmem>>, vector<32x32xbf16>
    %10 = arith.truncf %0 : vector<16x32xf32> to vector<16x32xbf16>
    %cst_9 = arith.constant dense<0.000000e+00> : vector<16x32xf32>
    %11 = tpu.matmul %10, %9, %cst_9 {dimension_numbers = #tpu.dot_dimension_numbers<[1], [0], [0], [1], [0, 0, 1, 1], [], []>} : vector<16x32xbf16>, vector<32x32xbf16>, vector<16x32xf32> -> vector<16x32xf32>
    %c0_10 = arith.constant 0 : index
    %c0_11 = arith.constant 0 : index
    %12 = vector.load %arg6[%c0_10, %c0_11] : memref<1x32xf32, #tpu.memory_space<vmem>>, vector<1x32xf32>
    %13 = vector.broadcast %12 : vector<1x32xf32> to vector<16x32xf32>
    %14 = arith.addf %11, %13 : vector<16x32xf32>
    %15 = arith.truncf %8 : vector<16x64xf32> to vector<16x64xbf16>
    %c0_12 = arith.constant 0 : index
    %c0_13 = arith.constant 0 : index
    %16 = vector.load %arg7[%c0_12, %c0_13] : memref<16x96xbf16, #tpu.memory_space<vmem>>, vector<16x64xbf16>
    tpu.vector_store %arg7[%c0_12, %c0_13], %15 {strides = array<i32>} : memref<16x96xbf16, #tpu.memory_space<vmem>>, vector<16x64xbf16>,
    %17 = arith.truncf %14 : vector<16x32xf32> to vector<16x32xbf16>
    %c0_14 = arith.constant 0 : index
    %c64 = arith.constant 64 : index
    %18 = vector.load %arg7[%c0_14, %c64] : memref<16x96xbf16, #tpu.memory_space<vmem>>, vector<16x32xbf16>
    tpu.vector_store %arg7[%c0_14, %c64], %17 {strides = array<i32>} : memref<16x96xbf16, #tpu.memory_space<vmem>>, vector<16x32xbf16>,
    return
  }
  func.func @transform_0(%arg0: i32) -> (i32, i32) {
    %c0_i32 = arith.constant 0 : i32
    %c0_i32_0 = arith.constant 0 : i32
    return %arg0, %c0_i32 : i32, i32
  }
  func.func @transform_1(%arg0: i32) -> (i32, i32) {
    %c0_i32 = arith.constant 0 : i32
    %c0_i32_0 = arith.constant 0 : i32
    return %arg0, %c0_i32 : i32, i32
  }
  func.func @transform_2(%arg0: i32) -> (i32, i32) {
    %c0_i32 = arith.constant 0 : i32
    %c0_i32_0 = arith.constant 0 : i32
    %c0_i32_1 = arith.constant 0 : i32
    return %c0_i32, %c0_i32_0 : i32, i32
  }
  func.func @transform_3(%arg0: i32) -> (i32, i32) {
    %c0_i32 = arith.constant 0 : i32
    %c0_i32_0 = arith.constant 0 : i32
    %c0_i32_1 = arith.constant 0 : i32
    return %c0_i32, %c0_i32_0 : i32, i32
  }
  func.func @transform_4(%arg0: i32) -> (i32, i32) {
    %c0_i32 = arith.constant 0 : i32
    %c0_i32_0 = arith.constant 0 : i32
    %c0_i32_1 = arith.constant 0 : i32
    return %c0_i32, %c0_i32_0 : i32, i32
  }
  func.func @transform_5(%arg0: i32) -> (i32, i32) {
    %c0_i32 = arith.constant 0 : i32
    %c0_i32_0 = arith.constant 0 : i32
    %c0_i32_1 = arith.constant 0 : i32
    return %c0_i32, %c0_i32_0 : i32, i32
  }
  func.func @transform_6(%arg0: i32) -> (i32, i32) {
    %c0_i32 = arith.constant 0 : i32
    %c0_i32_0 = arith.constant 0 : i32
    return %arg0, %c0_i32 : i32, i32
  }
}

</mosaic_0001>

<llo_original>
// kernel: tpu_custom_call.1
$region0: #{tpu_custom_call.1}
  #allocation0 [shape = 'u32[]', space=smem, size = 0x4, offset = 0x4, fixed_abs, tag = 'smem constant byte address 0x4 - core index']
  #allocation1 [shape = 'u32[72,128]{1,0:T(1,128)}', space=vmem, size = 0x9000, scoped, tag = 'internal scratch']
  %s0 = inlined_call_operand.hbm [shape: f32[32,32], index: 0, kind: input, shape index: {}]
  %s1 = inlined_call_operand.hbm [shape: f32[32,32], index: 1, kind: input, shape index: {}]
  %s2 = inlined_call_operand.hbm [shape: bf16[32,64], index: 2, kind: input, shape index: {}]
  %s3 = inlined_call_operand.vmem [shape: f32[1,64], index: 3, kind: input, shape index: {}]
  %s4 = inlined_call_operand.hbm [shape: bf16[32,32], index: 4, kind: input, shape index: {}]
  %s5 = inlined_call_operand.vmem [shape: f32[1,32], index: 5, kind: input, shape index: {}]
  %s6 = inlined_call_operand.hbm [shape: bf16[32,96], index: 6, kind: output, shape index: {}]
  %s7 = sld [smem:[#allocation0]]
  $region73: #{tpu_custom_call.1} parent=0
    _
  %s9 = ssub.s32 1, %s7
  %s10 = scalar_select 0, %s9, %s7
  $region1: #{tpu_custom_call.1} parent=0
    #allocation2 [shape = 'u8[16384]{0}', space=vmem, size = 0x4000, scoped, tag = 'input window, operand 0']
    #allocation3 [shape = 's32[2]{0}', space=sflag, size = 0x8, scoped, tag = 'scoped memory for tpu_custom_call.1']
    #allocation4 [shape = 's32[2]{0}', space=sflag, size = 0x8, scoped, tag = 'scoped memory for tpu_custom_call.1']
    #allocation5 [shape = 'u8[16384]{0}', space=vmem, size = 0x4000, scoped, tag = 'input window, operand 1']
    #allocation6 [shape = 's32[2]{0}', space=sflag, size = 0x8, scoped, tag = 'scoped memory for tpu_custom_call.1']
    #allocation7 [shape = 'u8[8192]{0}', space=vmem, size = 0x2000, scoped, tag = 'input window, operand 2, single buffered']
    #allocation8 [shape = 'u8[8192]{0}', space=vmem, size = 0x2000, scoped, tag = 'input window, operand 4, single buffered']
    #allocation9 [shape = 's32[1]{0}', space=sflag, size = 0x4, scoped, tag = 'scoped memory for tpu_custom_call.1']
    #allocation10 [shape = 'u8[8192]{0}', space=vmem, size = 0x2000, scoped, tag = 'output window, operand 0']
    %11 = vsyncpa [#allocation3], 0
    %s12 = scalar_lea.sflag [#allocation3], 1
    %13 = vsyncpa %s12, 0
    %14 = vsyncpa [#allocation6], 0
    %s15 = scalar_lea.sflag [#allocation6], 1
    %16 = vsyncpa %s15, 0
    %17 = vsyncpa [#allocation9], 0
    %18 = vsyncpa [#allocation4], 0
    %s19 = scalar_lea.sflag [#allocation4], 1
    %20 = vsyncpa %s19, 0
    loop: start=0, step=1, limit=4
    $region2: #{tpu_custom_call.1} parent=1 // loop_pre_header
      _
    $region3: #{tpu_custom_call.1} parent=1 // loop_header
      %s22 = sphi 0, %s26
      %p23 = scmp.ge.s32.totalorder %s22, 4
      %s32 = sphi 0, %s34
      %s35 = sphi 0, %s32
      %s36 = sphi 0, %s35
      %s52 = sphi 0, %s36
      %s58 = sphi 0, %s60
      %s61 = sphi 0, %s58
      %s62 = sphi 0, %s61
      %s78 = sphi 0, %s62
      %s82 = sphi 0, %s82
      %s84 = sphi 0, %s82
      %s85 = sphi 0, %s84
      %s99 = sphi 0, %s85
      %s103 = sphi 0, %s103
      %s105 = sphi 0, %s103
      %s106 = sphi 0, %s105
      %s120 = sphi 0, %s106
      %s124 = sphi 0, %s124
      %s126 = sphi 0, %s124
      %s127 = sphi 0, %s126
      %s141 = sphi 0, %s127
      %s145 = sphi 0, %s145
      %s147 = sphi 0, %s145
      %s148 = sphi 0, %s147
      %s162 = sphi 0, %s148
      %s168 = sphi 0, %s170
      %s171 = sphi 0, %s168
      %s172 = sphi 0, %s171
      %s188 = sphi 0, %s172
    $region4: #{tpu_custom_call.1} parent=1 // loop_header_branch
      %25 = sbr.rel (%p23) target = $region8
    $region5: #{tpu_custom_call.1} parent=1 // loop_body
      %s27 = ssub.s32 %s22, 1
      %s28 = ssub.s32 %s22, 2
      %s29 = sadd.s32 %s22, 1
      %s30 = ssub.s32 %s22, %s29
      %p31 = scmp.eq.s32.totalorder %s30, 0
      %s33 = sadd.s32 %s32, 1
      %s34 = scalar_select %p31, %s32, %s33
      %p37 = pneg %p31
      %p38 = scmp.eq.s32.totalorder %s22, 1
      %p39 = por %p37, %p38
      %p40 = scmp.ne.s32.totalorder %s32, %s35
      %p41 = scmp.eq.s32.totalorder %s22, 0
      %p42 = por %p40, %p41
      %p43 = scmp.ne.s32.totalorder %s32, %s35
      %p44 = scmp.eq.s32.totalorder %s27, 1
      %p45 = por %p43, %p44
      %p46 = scmp.ne.s32.totalorder %s35, %s36
      %p47 = scmp.eq.s32.totalorder %s27, 0
      %p48 = por %p46, %p47
      %p49 = scmp.ne.s32.totalorder %s35, %s36
      %p50 = scmp.eq.s32.totalorder %s28, 1
      %p51 = por %p49, %p50
      %p53 = scmp.ne.s32.totalorder %s36, %s52
      %p54 = scmp.eq.s32.totalorder %s28, 0
      %p55 = por %p53, %p54
      %s56 = ssub.s32 %s22, %s29
      %p57 = scmp.eq.s32.totalorder %s56, 0
      %s59 = sadd.s32 %s58, 1
      %s60 = scalar_select %p57, %s58, %s59
      %p63 = pneg %p57
      %p64 = scmp.eq.s32.totalorder %s22, 1
      %p65 = por %p63, %p64
      %p66 = scmp.ne.s32.totalorder %s58, %s61
      %p67 = scmp.eq.s32.totalorder %s22, 0
      %p68 = por %p66, %p67
      %p69 = scmp.ne.s32.totalorder %s58, %s61
      %p70 = scmp.eq.s32.totalorder %s27, 1
      %p71 = por %p69, %p70
      %p72 = scmp.ne.s32.totalorder %s61, %s62
      %p73 = scmp.eq.s32.totalorder %s27, 0
      %p74 = por %p72, %p73
      %p75 = scmp.ne.s32.totalorder %s61, %s62
      %p76 = scmp.eq.s32.totalorder %s28, 1
      %p77 = por %p75, %p76
      %p79 = scmp.ne.s32.totalorder %s62, %s78
      %p80 = scmp.eq.s32.totalorder %s28, 0
      %p81 = por %p79, %p80
      %s83 = sadd.s32 %s82, 1
      %p86 = scmp.eq.s32.totalorder %s22, 1
      %p87 = scmp.ne.s32.totalorder %s82, %s84
      %p88 = scmp.eq.s32.totalorder %s22, 0
      %p89 = por %p87, %p88
      %p90 = scmp.ne.s32.totalorder %s82, %s84
      %p91 = scmp.eq.s32.totalorder %s27, 1
      %p92 = por %p90, %p91
      %p93 = scmp.ne.s32.totalorder %s84, %s85
      %p94 = scmp.eq.s32.totalorder %s27, 0
      %p95 = por %p93, %p94
      %p96 = scmp.ne.s32.totalorder %s84, %s85
      %p97 = scmp.eq.s32.totalorder %s28, 1
      %p98 = por %p96, %p97
      %p100 = scmp.ne.s32.totalorder %s85, %s99
      %p101 = scmp.eq.s32.totalorder %s28, 0
      %p102 = por %p100, %p101
      %s104 = sadd.s32 %s103, 1
      %p107 = scmp.eq.s32.totalorder %s22, 1
      %p108 = scmp.ne.s32.totalorder %s103, %s105
      %p109 = scmp.eq.s32.totalorder %s22, 0
      %p110 = por %p108, %p109
      %p111 = scmp.ne.s32.totalorder %s103, %s105
      %p112 = scmp.eq.s32.totalorder %s27, 1
      %p113 = por %p111, %p112
      %p114 = scmp.ne.s32.totalorder %s105, %s106
      %p115 = scmp.eq.s32.totalorder %s27, 0
      %p116 = por %p114, %p115
      %p117 = scmp.ne.s32.totalorder %s105, %s106
      %p118 = scmp.eq.s32.totalorder %s28, 1
      %p119 = por %p117, %p118
      %p121 = scmp.ne.s32.totalorder %s106, %s120
      %p122 = scmp.eq.s32.totalorder %s28, 0
      %p123 = por %p121, %p122
      %s125 = sadd.s32 %s124, 1
      %p128 = scmp.eq.s32.totalorder %s22, 1
      %p129 = scmp.ne.s32.totalorder %s124, %s126
      %p130 = scmp.eq.s32.totalorder %s22, 0
      %p131 = por %p129, %p130
      %p132 = scmp.ne.s32.totalorder %s124, %s126
      %p133 = scmp.eq.s32.totalorder %s27, 1
      %p134 = por %p132, %p133
      %p135 = scmp.ne.s32.totalorder %s126, %s127
      %p136 = scmp.eq.s32.totalorder %s27, 0
      %p137 = por %p135, %p136
      %p138 = scmp.ne.s32.totalorder %s126, %s127
      %p139 = scmp.eq.s32.totalorder %s28, 1
      %p140 = por %p138, %p139
      %p142 = scmp.ne.s32.totalorder %s127, %s141
      %p143 = scmp.eq.s32.totalorder %s28, 0
      %p144 = por %p142, %p143
      %s146 = sadd.s32 %s145, 1
      %p149 = scmp.eq.s32.totalorder %s22, 1
      %p150 = scmp.ne.s32.totalorder %s145, %s147
      %p151 = scmp.eq.s32.totalorder %s22, 0
      %p152 = por %p150, %p151
      %p153 = scmp.ne.s32.totalorder %s145, %s147
      %p154 = scmp.eq.s32.totalorder %s27, 1
      %p155 = por %p153, %p154
      %p156 = scmp.ne.s32.totalorder %s147, %s148
      %p157 = scmp.eq.s32.totalorder %s27, 0
      %p158 = por %p156, %p157
      %p159 = scmp.ne.s32.totalorder %s147, %s148
      %p160 = scmp.eq.s32.totalorder %s28, 1
      %p161 = por %p159, %p160
      %p163 = scmp.ne.s32.totalorder %s148, %s162
      %p164 = scmp.eq.s32.totalorder %s28, 0
      %p165 = por %p163, %p164
      %s166 = ssub.s32 %s22, %s29
      %p167 = scmp.eq.s32.totalorder %s166, 0
      %s169 = sadd.s32 %s168, 1
      %s170 = scalar_select %p167, %s168, %s169
      %p173 = pneg %p167
      %p174 = scmp.eq.s32.totalorder %s22, 1
      %p175 = por %p173, %p174
      %p176 = scmp.ne.s32.totalorder %s168, %s171
      %p177 = scmp.eq.s32.totalorder %s22, 0
      %p178 = por %p176, %p177
      %p179 = scmp.ne.s32.totalorder %s168, %s171
      %p180 = scmp.eq.s32.totalorder %s27, 1
      %p181 = por %p179, %p180
      %p182 = scmp.ne.s32.totalorder %s171, %s172
      %p183 = scmp.eq.s32.totalorder %s27, 0
      %p184 = por %p182, %p183
      %p185 = scmp.ne.s32.totalorder %s171, %s172
      %p186 = scmp.eq.s32.totalorder %s28, 1
      %p187 = por %p185, %p186
      %p189 = scmp.ne.s32.totalorder %s172, %s188
      %p190 = scmp.eq.s32.totalorder %s28, 0
      %p191 = por %p189, %p190
      %p192 = scmp.le.s32.totalorder 1, %s22
      %p193 = scmp.lt.s32.totalorder %s22, 3
      %p194 = pnand %p192, %p193
      %p195 = pneg %p194
      // Predicated region
      $region9: #{tpu_custom_call.1} parent=5 // pred_check
        _
      $region10: #{tpu_custom_call.1} parent=5 // pred_check_branch
        %197 = sbr.rel (%p194) target = $region12
      $region11: #{tpu_custom_call.1} parent=5 // pred_region
        %s198 = ssub.s32 %s22, 1
        // Predicated region
        $region13: #{tpu_custom_call.1} parent=11 // pred_check
          %p199 = pneg %p95
        $region14: #{tpu_custom_call.1} parent=11 // pred_check_branch
          %201 = sbr.rel (%p199) target = $region16
        $region15: #{tpu_custom_call.1} parent=11 // pred_region
          %203 = vsyncadd [#allocation6], 0
          %s204 = sshll.u32 %s2, 4
          %s205 = int_to_ptr.hbm [resolvable:$true] %s204
          %s206 = sshll.u32 [#allocation7], 4
          %s207 = int_to_ptr.vmem [resolvable:$true] %s206
          %212 = dma.hbm_to_vmem [thread:$0]  %s205, 256, %s207, [#allocation6], 64, 64, 4
        $region16: #{tpu_custom_call.1} parent=11 // pred_fallthru
          _
        // Predicated region
        $region17: #{tpu_custom_call.1} parent=11 // pred_check
          %p213 = pneg %p116
        $region18: #{tpu_custom_call.1} parent=11 // pred_check_branch
          %215 = sbr.rel (%p213) target = $region20
        $region19: #{tpu_custom_call.1} parent=11 // pred_region
          _
        $region20: #{tpu_custom_call.1} parent=11 // pred_fallthru
          _
        // Predicated region
        $region21: #{tpu_custom_call.1} parent=11 // pred_check
          %p216 = pneg %p137
        $region22: #{tpu_custom_call.1} parent=11 // pred_check_branch
          %218 = sbr.rel (%p216) target = $region24
        $region23: #{tpu_custom_call.1} parent=11 // pred_region
          %220 = vsyncadd [#allocation9], 0
          %s221 = sshll.u32 %s4, 4
          %s222 = int_to_ptr.hbm [resolvable:$true] %s221
          %s223 = sshll.u32 [#allocation8], 4
          %s224 = int_to_ptr.vmem [resolvable:$true] %s223
          %229 = dma.hbm_to_vmem [thread:$0]  %s222, 256, %s224, [#allocation9], 64, 64, 4
        $region24: #{tpu_custom_call.1} parent=11 // pred_fallthru
          _
        // Predicated region
        $region25: #{tpu_custom_call.1} parent=11 // pred_check
          %p230 = pneg %p158
        $region26: #{tpu_custom_call.1} parent=11 // pred_check_branch
          %232 = sbr.rel (%p230) target = $region28
        $region27: #{tpu_custom_call.1} parent=11 // pred_region
          _
        $region28: #{tpu_custom_call.1} parent=11 // pred_fallthru
          _
      $region12: #{tpu_custom_call.1} parent=5 // pred_fallthru
        _
      %p233 = scmp.lt.s32.totalorder %s22, 2
      // Predicated region
      $region29: #{tpu_custom_call.1} parent=5 // pred_check
        %p234 = pneg %p233
      $region30: #{tpu_custom_call.1} parent=5 // pred_check_branch
        %236 = sbr.rel (%p234) target = $region32
      $region31: #{tpu_custom_call.1} parent=5 // pred_region
        // Predicated region
        $region33: #{tpu_custom_call.1} parent=31 // pred_check
          %p237 = pneg %p42
        $region34: #{tpu_custom_call.1} parent=31 // pred_check_branch
          %239 = sbr.rel (%p237) target = $region36
        $region35: #{tpu_custom_call.1} parent=31 // pred_region
          %s240 = sand.u32 %s32, 1
          %s241 = scalar_lea.sflag [#allocation3], %s240
          %s242 = sand.u32 %s32, 1
          %s243 = smul.addr %s242, 16
          %s244 = scalar_lea.vmem [#allocation2], %s243
          %s245 = smul.u32 2, %s22
          %247 = vsyncadd %s241, 0
          %s248 = smul.addr %s245, 8
          %s249 = scalar_lea.hbm %s0, %s248
          %s250 = sshll.u32 %s249, 4
          %s251 = int_to_ptr.hbm [resolvable:$true] %s250
          %s252 = sshll.u32 %s244, 4
          %s253 = int_to_ptr.vmem [resolvable:$true] %s252
          %258 = dma.hbm_to_vmem [thread:$0]  %s251, 256, %s253, %s241, 128, 128, 8
        $region36: #{tpu_custom_call.1} parent=31 // pred_fallthru
          _
        // Predicated region
        $region37: #{tpu_custom_call.1} parent=31 // pred_check
          %p259 = pneg %p68
        $region38: #{tpu_custom_call.1} parent=31 // pred_check_branch
          %261 = sbr.rel (%p259) target = $region40
        $region39: #{tpu_custom_call.1} parent=31 // pred_region
          %s262 = sand.u32 %s22, 1
          %s263 = scalar_lea.sflag [#allocation6], %s262
          %s264 = sand.u32 %s58, 1
          %s265 = smul.addr %s264, 16
          %s266 = scalar_lea.vmem [#allocation5], %s265
          %s267 = smul.u32 2, %s22
          %269 = vsyncadd %s263, 0
          %s270 = smul.addr %s267, 8
          %s271 = scalar_lea.hbm %s1, %s270
          %s272 = sshll.u32 %s271, 4
          %s273 = int_to_ptr.hbm [resolvable:$true] %s272
          %s274 = sshll.u32 %s266, 4
          %s275 = int_to_ptr.vmem [resolvable:$true] %s274
          %280 = dma.hbm_to_vmem [thread:$0]  %s273, 256, %s275, %s263, 128, 128, 8
        $region40: #{tpu_custom_call.1} parent=31 // pred_fallthru
          _
      $region32: #{tpu_custom_call.1} parent=5 // pred_fallthru
        _
      %p281 = scmp.le.s32.totalorder 1, %s22
      %p282 = scmp.lt.s32.totalorder %s22, 3
      %p283 = pnand %p281, %p282
      %p284 = pneg %p283
      // Predicated region
      $region41: #{tpu_custom_call.1} parent=5 // pred_check
        _
      $region42: #{tpu_custom_call.1} parent=5 // pred_check_branch
        %286 = sbr.rel (%p283) target = $region44
      $region43: #{tpu_custom_call.1} parent=5 // pred_region
        %s287 = ssub.s32 %s22, 1
        %s288 = sand.u32 %s35, 1
        %s289 = scalar_lea.sflag [#allocation3], %s288
        %s290 = sand.u32 %s35, 1
        %s291 = smul.addr %s290, 16
        %s292 = scalar_lea.vmem [#allocation2], %s291
        // Predicated region
        $region45: #{tpu_custom_call.1} parent=43 // pred_check
          %p293 = pneg %p48
        $region46: #{tpu_custom_call.1} parent=43 // pred_check_branch
          %295 = sbr.rel (%p293) target = $region48
        $region47: #{tpu_custom_call.1} parent=43 // pred_region
          %297 = dma.done %s289, 256
        $region48: #{tpu_custom_call.1} parent=43 // pred_fallthru
          _
        %s298 = sand.u32 %s27, 1
        %s299 = scalar_lea.sflag [#allocation6], %s298
        %s300 = sand.u32 %s61, 1
        %s301 = smul.addr %s300, 16
        %s302 = scalar_lea.vmem [#allocation5], %s301
        // Predicated region
        $region49: #{tpu_custom_call.1} parent=43 // pred_check
          %p303 = pneg %p74
        $region50: #{tpu_custom_call.1} parent=43 // pred_check_branch
          %305 = sbr.rel (%p303) target = $region52
        $region51: #{tpu_custom_call.1} parent=43 // pred_region
          %307 = dma.done %s299, 256
        $region52: #{tpu_custom_call.1} parent=43 // pred_fallthru
          _
        // Predicated region
        $region53: #{tpu_custom_call.1} parent=43 // pred_check
          %p308 = pneg %p95
        $region54: #{tpu_custom_call.1} parent=43 // pred_check_branch
          %310 = sbr.rel (%p308) target = $region56
        $region55: #{tpu_custom_call.1} parent=43 // pred_region
          %312 = dma.done [#allocation6], 256
        $region56: #{tpu_custom_call.1} parent=43 // pred_fallthru
          _
        // Predicated region
        $region57: #{tpu_custom_call.1} parent=43 // pred_check
          %p313 = pneg %p137
        $region58: #{tpu_custom_call.1} parent=43 // pred_check_branch
          %315 = sbr.rel (%p313) target = $region60
        $region59: #{tpu_custom_call.1} parent=43 // pred_region
          %317 = dma.done [#allocation9], 256
        $region60: #{tpu_custom_call.1} parent=43 // pred_fallthru
          _
        %s318 = sand.u32 %s35, 1
        %s319 = scalar_lea.sflag [#allocation3], %s318
        %s320 = sand.u32 %s35, 1
        %s321 = smul.addr %s320, 16
        %s322 = scalar_lea.vmem [#allocation2], %s321
        %p323 = pneg %p48
        %p324 = pneg %p45
        %s325 = sand.u32 %s27, 1
        %s326 = scalar_lea.sflag [#allocation6], %s325
        %s327 = sand.u32 %s61, 1
        %s328 = smul.addr %s327, 16
        %s329 = scalar_lea.vmem [#allocation5], %s328
        %p330 = pneg %p74
        %p331 = pneg %p71
        %p332 = pneg %p95
        %p333 = pneg %p92
        %p334 = pneg %p116
        %p335 = pneg %p113
        %p336 = pneg %p137
        %p337 = pneg %p134
        %p338 = pneg %p158
        %p339 = pneg %p155
        %p340 = pneg %p184
        %p341 = pneg %p181
        %s342 = sand.u32 %s171, 1
        %s343 = scalar_lea.sflag [#allocation4], %s342
        %s344 = sand.u32 %s171, 1
        %s345 = smul.addr %s344, 8
        %s346 = scalar_lea.vmem [#allocation10], %s345
        %s347 = smul.u32 2, %s27
        %s348 = smul.u32 2, %s27
        %s349 = smul.u32 2, %s27
        %v351 = vld [vmem:[%s292] sm:$0xff]
        %v352 = vld [vmem:[%s292 + $0x8] sm:$0xff]
        %v353 = vld [vmem:[%s302] sm:$0xff]
        %v354 = vld [vmem:[%s302 + $0x8] sm:$0xff]
        %v355 = vadd.f32 %v351, %v353
        %v356 = vadd.f32 %v352, %v354
        %v357 = vld [vmem:[#allocation7] sm:$0xf]
        %v358 = vld [vmem:[#allocation7 + $0x4] sm:$0xf]
        %v359 = vld [vmem:[#allocation7 + $0x8] sm:$0xf]
        %v360 = vld [vmem:[#allocation7 + $0xc] sm:$0xf]
        %v361 = vpack.c.bf16 %v356, %v355
        %v362 = vld [vmem:[%s3] sm:$0x1]
        %v364 = vperm.slane %v362, 0
        %v370 = vunpack.c.l.b16 %v357
        %v371 = vunpack.c.l.b16 %v358
        %v372 = vunpack.c.l.b16 %v359
        %v373 = vunpack.c.l.b16 %v360
        %v374 = vpack.c.b16 %v371, %v370
        %v375 = vpack.c.b16 %v373, %v372
        %vm378 = vcmask 261120
        %v380 = vsel %vm378, %v361, 0
        %382 = vmatpush.bf16.msra.mxu0 0
        %383 = vmatpush.bf16.msra.mxu0 0
        %384 = vmatpush.bf16.msra.mxu0 0
        %385 = vmatpush.bf16.msra.mxu0 0
        %386 = vmatpush.bf16.msra.mxu0 0
        %387 = vmatpush.bf16.msra.mxu0 0
        %388 = vmatpush.bf16.msra.mxu0 %v375
        %389 = vmatpush.bf16.msra.mxu0 %v374
        %390 = vmatmul.bf16.gmra.mxu0 %v380
        %v391 = vpop.f32.mrf.mxu0
        %v392 = vadd.f32 %v364, %v391
        %v393 = vpop.f32.mrf.mxu0
        %v394 = vadd.f32 %v364, %v393
        %395 = vdwg.mxu0
        %v396 = vld [vmem:[#allocation8] sm:$0xf]
        %v397 = vld [vmem:[#allocation8 + $0x4] sm:$0xf]
        %v398 = vld [vmem:[#allocation8 + $0x8] sm:$0xf]
        %v399 = vld [vmem:[#allocation8 + $0xc] sm:$0xf]
        %v400 = vpack.c.bf16 %v352, %v351
        %v401 = vld [vmem:[%s5] sm:$0x1]
        %v403 = vperm.slane %v401, 0
        %v409 = vunpack.c.l.b16 %v396
        %v410 = vunpack.c.l.b16 %v397
        %v411 = vunpack.c.l.b16 %v398
        %v412 = vunpack.c.l.b16 %v399
        %v413 = vpack.c.b16 %v410, %v409
        %v414 = vpack.c.b16 %v412, %v411
        %v418 = vsel %vm378, %v400, 0
        %420 = vmatpush.bf16.msra.mxu0 0
        %421 = vmatpush.bf16.msra.mxu0 0
        %422 = vmatpush.bf16.msra.mxu0 0
        %423 = vmatpush.bf16.msra.mxu0 0
        %424 = vmatpush.bf16.msra.mxu0 0
        %425 = vmatpush.bf16.msra.mxu0 0
        %426 = vmatpush.bf16.msra.mxu0 %v414
        %427 = vmatpush.bf16.msra.mxu0 %v413
        %428 = vmatmul.bf16.gmra.mxu0 %v418
        %v429 = vpop.f32.mrf.mxu0
        %v430 = vadd.f32 %v403, %v429
        %v431 = vpop.f32.mrf.mxu0
        %v432 = vadd.f32 %v403, %v431
        %433 = vdwg.mxu0
        %v434 = vpack.c.bf16 %v392, %v392
        %v435 = vpack.c.bf16 %v394, %v394
        %vm436 = vcmask 519168
        %437 = vst.msk [vmem:[%s346] sm:$0xf] %vm436, %v434
        %438 = vst.msk [vmem:[%s346 + $0x4] sm:$0xf] %vm436, %v435
        %v439 = vpack.c.bf16 %v430, %v430
        %v440 = vpack.c.bf16 %v432, %v432
        %443 = vrot.lane.b32.xlu0 %v439, 64
        %v444 = vpop.permute.xlu0 %443
        %445 = vrot.lane.b32.xlu0 %v440, 64
        %v446 = vpop.permute.xlu0 %445
        %vm449 = vcmask 781824
        %450 = vst.msk [vmem:[%s346] sm:$0xf] %vm449, %v444
        %451 = vst.msk [vmem:[%s346 + $0x4] sm:$0xf] %vm449, %v446
        %s452 = sand.u32 %s171, 1
        %s453 = scalar_lea.sflag [#allocation4], %s452
        %s454 = sand.u32 %s171, 1
        %s455 = smul.addr %s454, 8
        %s456 = scalar_lea.vmem [#allocation10], %s455
        // Predicated region
        $region61: #{tpu_custom_call.1} parent=43 // pred_check
          %p457 = pneg %p181
        $region62: #{tpu_custom_call.1} parent=43 // pred_check_branch
          %459 = sbr.rel (%p457) target = $region64
        $region63: #{tpu_custom_call.1} parent=43 // pred_region
          %s460 = smul.u32 2, %s27
          %462 = vsyncadd %s453, 0
          %s463 = smul.addr %s460, 4
          %s464 = scalar_lea.hbm %s6, %s463
          %s465 = sshll.u32 %s456, 4
          %s466 = int_to_ptr.vmem [resolvable:$true] %s465
          %s467 = sshll.u32 %s464, 4
          %s468 = int_to_ptr.hbm [resolvable:$true] %s467
          %473 = dma.vmem_to_hbm [thread:$0]  %s466, 128, %s468, %s453, 64, 64, 4
        $region64: #{tpu_custom_call.1} parent=43 // pred_fallthru
          _
      $region44: #{tpu_custom_call.1} parent=5 // pred_fallthru
        _
      %p474 = scmp.le.s32.totalorder 2, %s22
      // Predicated region
      $region65: #{tpu_custom_call.1} parent=5 // pred_check
        %p475 = pneg %p474
      $region66: #{tpu_custom_call.1} parent=5 // pred_check_branch
        %477 = sbr.rel (%p475) target = $region68
      $region67: #{tpu_custom_call.1} parent=5 // pred_region
        %s478 = ssub.s32 %s22, 2
        // Predicated region
        $region69: #{tpu_custom_call.1} parent=67 // pred_check
          %p479 = pneg %p187
        $region70: #{tpu_custom_call.1} parent=67 // pred_check_branch
          %481 = sbr.rel (%p479) target = $region72
        $region71: #{tpu_custom_call.1} parent=67 // pred_region
          %s482 = sand.u32 %s172, 1
          %s483 = scalar_lea.sflag [#allocation4], %s482
          %s484 = sand.u32 %s172, 1
          %s485 = smul.addr %s484, 8
          %s486 = scalar_lea.vmem [#allocation10], %s485
          %488 = dma.done %s483, 128
        $region72: #{tpu_custom_call.1} parent=67 // pred_fallthru
          _
      $region68: #{tpu_custom_call.1} parent=5 // pred_fallthru
        _
    $region6: #{tpu_custom_call.1} parent=1 // loop_footer
      %s26 = sadd.s32 1, %s22
    $region7: #{tpu_custom_call.1} parent=1 // loop_footer_branch
      %21 = sbr.rel target = $region3
    $region8: #{tpu_custom_call.1} parent=1 // loop_exit
      _
    %489 = vsyncpa [#allocation3], 1
    %s490 = scalar_lea.sflag [#allocation3], 1
    %491 = vsyncpa %s490, 1
    %492 = vsyncpa [#allocation6], 1
    %s493 = scalar_lea.sflag [#allocation6], 1
    %494 = vsyncpa %s493, 1
    %495 = vsyncpa [#allocation9], 1
    %496 = vsyncpa [#allocation4], 1
    %s497 = scalar_lea.sflag [#allocation4], 1
    %498 = vsyncpa %s497, 1

</llo_original>
